<compile_context>
chip_gen: v5e
topology: v5e:2x2
jax: 0.10.0
libtpu: 0.0.40
codegen_flags: <defaults>
</compile_context>

<pallas_src>
import functools

import jax
import jax.numpy as jnp
from jax.experimental import pallas as pl
from jax.experimental.pallas import tpu as pltpu


def _mha_kernel(hq_ref, hc_ref, wq_ref, wkv_ref, wo_ref, g_ref, b_ref, o_ref,
                kv_ref, *, n_head, d_head, scale, eps, compute_dtype):
    HD = n_head * d_head
    cdt = jnp.dtype(compute_dtype)
    approx = cdt != jnp.dtype(jnp.float32)

    # --- K/V projection: once per batch element, cached across q tiles ------
    @pl.when(pl.program_id(1) == 0)
    def _():
        xc_c = hc_ref[0].astype(cdt)                      # (T, C) full sequence
        kv = jnp.dot(xc_c, wkv_ref[...],                  # (T, 2*H*D), f32 acc
                     preferred_element_type=jnp.float32)
        kv_ref[...] = kv.astype(cdt)

    # --- Q projection for this query tile (scale folded in) -----------------
    xq_raw = hq_ref[0]                                    # (tq, C)
    xq_f32 = xq_raw.astype(jnp.float32)                   # residual rows (f32)
    xq_c = xq_raw.astype(cdt)
    q = jnp.dot(xq_c, wq_ref[...],
                preferred_element_type=jnp.float32) * scale
    q = q.astype(cdt)                                     # (tq, H*D)

    k = kv_ref[:, :HD]                                    # (T, H*D) cached
    v = kv_ref[:, HD:]                                    # (T, H*D) cached

    # --- Per-head attention (unrolled; only (tq, T) scores live per head) ---
    chunks = []
    for head in range(n_head):
        sl = slice(head * d_head, (head + 1) * d_head)
        qh, kh, vh = q[:, sl], k[:, sl], v[:, sl]
        s = jnp.einsum('qd,kd->qk', qh, kh,
                       preferred_element_type=jnp.float32)        # (tq, T)
        s = s - jnp.max(s, axis=-1, keepdims=True)
        p = jnp.exp(s)
        p = p * pl.reciprocal(jnp.sum(p, axis=-1, keepdims=True), approx=approx)
        chunks.append(jnp.dot(p.astype(cdt), vh,
                              preferred_element_type=jnp.float32))  # (tq, D)
    attn_vec = jnp.concatenate(chunks, axis=-1)           # (tq, H*D) f32

    # --- Single output projection (tq, H*D) @ (H*D, C) -----------------------
    attn_out = jnp.dot(attn_vec.astype(cdt), wo_ref[...],
                       preferred_element_type=jnp.float32)          # (tq, C)

    # --- Residual + post-LayerNorm (pre_lnorm=False), all f32 ----------------
    y = xq_f32 + attn_out
    mu = jnp.mean(y, axis=-1, keepdims=True)
    var = jnp.mean((y - mu) * (y - mu), axis=-1, keepdims=True)
    yn = (y - mu) * jax.lax.rsqrt(var + eps)
    o_ref[0] = (yn * g_ref[...] + b_ref[...]).astype(o_ref.dtype)


def _pick_q_block(T, cap):
    """Largest q tile <= cap that divides T and is a multiple of 8, else T."""
    cap = min(cap, T)
    start = cap - cap % 8
    for cand in range(start, 7, -8):
        if T % cand == 0:
            return cand
    return T


def multi_head_attn(h_btc, wq, wkv, wo, gamma, beta, *, n_head, d_head,
                    eps=1e-5, q_block=256, compute_dtype=jnp.bfloat16):
    """h_btc: (B, T, d_model).  wq: (C, H*D), wkv: (C, 2*H*D), wo: (H*D, C)."""
    B, T, C = h_btc.shape
    HD = n_head * d_head
    assert wq.shape == (C, HD) and wkv.shape == (C, 2 * HD) and wo.shape == (HD, C)
    scale = 1.0 / (d_head ** 0.5)

    tq = _pick_q_block(T, q_block)
    nq = T // tq

    cdt = jnp.dtype(compute_dtype)
    wq_c = wq.astype(cdt)
    wkv_c = wkv.astype(cdt)
    wo_c = wo.astype(cdt)
    gamma2 = gamma.reshape(1, C).astype(jnp.float32)
    beta2 = beta.reshape(1, C).astype(jnp.float32)

    kernel = functools.partial(_mha_kernel, n_head=n_head, d_head=d_head,
                               scale=scale, eps=eps, compute_dtype=compute_dtype)

    return pl.pallas_call(
        kernel,
        out_shape=jax.ShapeDtypeStruct((B, T, C), h_btc.dtype),
        grid_spec=pltpu.PrefetchScalarGridSpec(
            num_scalar_prefetch=0,
            grid=(B, nq),
            in_specs=[
                # query-tile view of h (also the residual rows)
                pl.BlockSpec((1, tq, C), lambda b, q: (b, q, 0)),
                # full-sequence view of h for K/V (constant over q -> one DMA per b)
                pl.BlockSpec((1, T, C), lambda b, q: (b, 0, 0)),
                # weights / LN params: constant index_map -> loaded once, resident
                pl.BlockSpec((C, HD), lambda b, q: (0, 0)),
                pl.BlockSpec((C, 2 * HD), lambda b, q: (0, 0)),
                pl.BlockSpec((HD, C), lambda b, q: (0, 0)),
                pl.BlockSpec((1, C), lambda b, q: (0, 0)),
                pl.BlockSpec((1, C), lambda b, q: (0, 0)),
            ],
            out_specs=pl.BlockSpec((1, tq, C), lambda b, q: (b, q, 0)),
            # K/V cache for the full sequence, persistent across the q-tile loop.
            scratch_shapes=[pltpu.VMEM((T, 2 * HD), cdt)],
        ),
        compiler_params=pltpu.CompilerParams(
            # q axis carries the K/V scratch -> must be "arbitrary" (sequential);
            # batch axis shards across megacore TensorCores.
            dimension_semantics=("parallel", "arbitrary")),
    )(h_btc, h_btc, wq_c, wkv_c, wo_c, gamma2, beta2)


def multi_head_attn_tbc(h_tbc, *args, **kwargs):
    """PyTorch-layout (T, B, C) compatibility wrapper."""
    out_btc = multi_head_attn(jnp.transpose(h_tbc, (1, 0, 2)), *args, **kwargs)
    return jnp.transpose(out_btc, (1, 0, 2))


def multi_head_attn_ref(h, wq, wkv, wo, gamma, beta, *, n_head, d_head, eps=1e-5):
    """Pure-JAX reference mirroring the PyTorch forward on (T, B, C)."""
    T, B, C = h.shape
    HD = n_head * d_head
    scale = 1.0 / (d_head ** 0.5)
    head_q = (h @ wq).reshape(T, B, n_head, d_head)
    head_kv = h @ wkv
    head_k = head_kv[..., :HD].reshape(T, B, n_head, d_head)
    head_v = head_kv[..., HD:].reshape(T, B, n_head, d_head)
    attn_score = jnp.einsum('ibnd,jbnd->ijbn', head_q, head_k) * scale
    attn_prob = jax.nn.softmax(attn_score, axis=1)
    attn_vec = jnp.einsum('ijbn,jbnd->ibnd', attn_prob, head_v)
    attn_vec = attn_vec.reshape(T, B, HD)
    attn_out = attn_vec @ wo
    y = h + attn_out
    mu = jnp.mean(y, axis=-1, keepdims=True)
    var = jnp.mean((y - mu) ** 2, axis=-1, keepdims=True)
    return (y - mu) * jax.lax.rsqrt(var + eps) * gamma + beta


if __name__ == "__main__":
    # Small, module-consistent shapes; d_model=128 keeps output stores lane-dense.
    n_head, d_model, d_head = 4, 128, 16
    seq_len, batch = 16, 2
    HD = n_head * d_head

    key = jax.random.PRNGKey(0)
    k_h, k_q, k_kv, k_o = jax.random.split(key, 4)

    h_btc = jax.random.normal(k_h, (batch, seq_len, d_model), dtype=jnp.float32)

    # Weights stored pre-transposed to (in, out) for right-multiplication.
    wq = jax.random.normal(k_q, (d_model, HD), jnp.float32) * 0.05
    wkv = jax.random.normal(k_kv, (d_model, 2 * HD), jnp.float32) * 0.05
    wo = jax.random.normal(k_o, (HD, d_model), jnp.float32) * 0.05
    gamma = jnp.ones((d_model,), jnp.float32)
    beta = jnp.zeros((d_model,), jnp.float32)

    # Reference (PyTorch layout math), mapped to (B, T, C) for comparison.
    h_tbc = jnp.transpose(h_btc, (1, 0, 2))
    ref_tbc = multi_head_attn_ref(h_tbc, wq, wkv, wo, gamma, beta,
                                  n_head=n_head, d_head=d_head)
    ref_btc = jnp.transpose(ref_tbc, (1, 0, 2))

    # (1) f32 compute path — strict numerical check (2 query tiles exercises
    #     the cached-K/V reuse path at q_tile > 0).
    out_f32 = multi_head_attn(h_btc, wq, wkv, wo, gamma, beta,
                              n_head=n_head, d_head=d_head,
                              q_block=8, compute_dtype=jnp.float32)
    out_f32 = jax.block_until_ready(out_f32)
    assert out_f32.shape == (batch, seq_len, d_model)
    err = jnp.max(jnp.abs(out_f32 - ref_btc))
    assert jnp.allclose(out_f32, ref_btc, atol=2e-4, rtol=2e-4), f"f32 max err {err}"

    # (2) bf16-operand fast path (default) — relaxed tolerance.
    out_bf16 = multi_head_attn(h_btc, wq, wkv, wo, gamma, beta,
                               n_head=n_head, d_head=d_head, q_block=8)
    out_bf16 = jax.block_until_ready(out_bf16)
    err_b = jnp.max(jnp.abs(out_bf16 - ref_btc))
    assert jnp.allclose(out_bf16, ref_btc, atol=3e-2, rtol=3e-2), f"bf16 max err {err_b}"

    # (3) PyTorch (T, B, C) layout wrapper — module-layout parity.
    out_tbc = multi_head_attn_tbc(h_tbc, wq, wkv, wo, gamma, beta,
                                  n_head=n_head, d_head=d_head,
                                  compute_dtype=jnp.float32)
    out_tbc = jax.block_until_ready(out_tbc)
    err_t = jnp.max(jnp.abs(out_tbc - ref_tbc))
    assert jnp.allclose(out_tbc, ref_tbc, atol=2e-4, rtol=2e-4), f"tbc max err {err_t}"

    print("KERNEL_OK")
</pallas_src>

<mosaic_0001>
module attributes {stable_mosaic.version = 11 : i64} {
  func.func @_mha_kernel(%arg0: i32, %arg1: i32, %arg2: memref<1x8x128xf32, #tpu.memory_space<vmem>>, %arg3: memref<1x16x128xf32, #tpu.memory_space<vmem>>, %arg4: memref<128x64xf32, #tpu.memory_space<vmem>>, %arg5: memref<128x128xf32, #tpu.memory_space<vmem>>, %arg6: memref<64x128xf32, #tpu.memory_space<vmem>>, %arg7: memref<1x128xf32, #tpu.memory_space<vmem>>, %arg8: memref<1x128xf32, #tpu.memory_space<vmem>>, %arg9: memref<1x8x128xf32, #tpu.memory_space<vmem>>, %arg10: memref<16x128xf32, #tpu.memory_space<vmem>>) attributes {dimension_semantics = [#tpu.dimension_semantics<parallel>, #tpu.dimension_semantics<arbitrary>], iteration_bounds = array<i64: 2, 2>, scalar_prefetch = 0 : i64, scratch_operands = 1 : i64, tpu.core_type = #tpu.core_type<tc>, window_params = [{transform_indices = @transform_0, window_bounds = array<i64: 1, 8, 128>}, {transform_indices = @transform_1, window_bounds = array<i64: 1, 16, 128>}, {pipeline_mode = #tpu.pipeline_mode<synchronous>, transform_indices = @transform_2, window_bounds = array<i64: 128, 64>}, {pipeline_mode = #tpu.pipeline_mode<synchronous>, transform_indices = @transform_3, window_bounds = array<i64: 128, 128>}, {pipeline_mode = #tpu.pipeline_mode<synchronous>, transform_indices = @transform_4, window_bounds = array<i64: 64, 128>}, {pipeline_mode = #tpu.pipeline_mode<synchronous>, transform_indices = @transform_5, window_bounds = array<i64: 1, 128>}, {pipeline_mode = #tpu.pipeline_mode<synchronous>, transform_indices = @transform_6, window_bounds = array<i64: 1, 128>}, {transform_indices = @transform_7, window_bounds = array<i64: 1, 8, 128>}]} {
    %c0_i32 = arith.constant 0 : i32
    %0 = arith.cmpi eq, %arg1, %c0_i32 : i32
    %1 = arith.extui %0 : i1 to i32
    %c0_i32_0 = arith.constant 0 : i32
    %2 = arith.cmpi ne, %1, %c0_i32_0 : i32
    scf.if %2 {
      %c0_40 = arith.constant 0 : index
      %c0_41 = arith.constant 0 : index
      %c0_42 = arith.constant 0 : index
      %104 = vector.load %arg3[%c0_40, %c0_41, %c0_42] : memref<1x16x128xf32, #tpu.memory_space<vmem>>, vector<1x16x128xf32>
      %105 = vector.shape_cast %104 : vector<1x16x128xf32> to vector<16x128xf32>
      %c0_43 = arith.constant 0 : index
      %c0_44 = arith.constant 0 : index
      %106 = vector.load %arg5[%c0_43, %c0_44] : memref<128x128xf32, #tpu.memory_space<vmem>>, vector<128x128xf32>
      %cst_45 = arith.constant dense<0.000000e+00> : vector<16x128xf32>
      %107 = tpu.matmul %105, %106, %cst_45 {dimension_numbers = #tpu.dot_dimension_numbers<[1], [0], [0], [1], [0, 0, 1, 1], [], []>} : vector<16x128xf32>, vector<128x128xf32>, vector<16x128xf32> -> vector<16x128xf32>
      %c0_46 = arith.constant 0 : index
      %c0_47 = arith.constant 0 : index
      %108 = vector.load %arg10[%c0_46, %c0_47] : memref<16x128xf32, #tpu.memory_space<vmem>>, vector<16x128xf32>
      tpu.vector_store %arg10[%c0_46, %c0_47], %107 {strides = array<i32>} : memref<16x128xf32, #tpu.memory_space<vmem>>, vector<16x128xf32>,
    } else {
    }
    %c0 = arith.constant 0 : index
    %c0_1 = arith.constant 0 : index
    %c0_2 = arith.constant 0 : index
    %3 = vector.load %arg2[%c0, %c0_1, %c0_2] : memref<1x8x128xf32, #tpu.memory_space<vmem>>, vector<1x8x128xf32>
    %4 = vector.shape_cast %3 : vector<1x8x128xf32> to vector<8x128xf32>
    %c0_3 = arith.constant 0 : index
    %c0_4 = arith.constant 0 : index
    %5 = vector.load %arg4[%c0_3, %c0_4] : memref<128x64xf32, #tpu.memory_space<vmem>>, vector<128x64xf32>
    %cst = arith.constant dense<0.000000e+00> : vector<8x64xf32>
    %6 = tpu.matmul %4, %5, %cst {dimension_numbers = #tpu.dot_dimension_numbers<[1], [0], [0], [1], [0, 0, 1, 1], [], []>} : vector<8x128xf32>, vector<128x64xf32>, vector<8x64xf32> -> vector<8x64xf32>
    %cst_5 = arith.constant 2.500000e-01 : f32
    %7 = vector.broadcast %cst_5 : f32 to vector<8x64xf32>
    %8 = arith.mulf %6, %7 : vector<8x64xf32>
    %c0_6 = arith.constant 0 : index
    %c0_7 = arith.constant 0 : index
    %9 = vector.load %arg10[%c0_6, %c0_7] : memref<16x128xf32, #tpu.memory_space<vmem>>, vector<16x64xf32>
    %c0_8 = arith.constant 0 : index
    %c64 = arith.constant 64 : index
    %10 = vector.load %arg10[%c0_8, %c64] : memref<16x128xf32, #tpu.memory_space<vmem>>, vector<16x64xf32>
    %11 = vector.extract_strided_slice %8 {offsets = [0, 0], sizes = [8, 16], strides = [1, 1]} : vector<8x64xf32> to vector<8x16xf32>
    %12 = vector.extract_strided_slice %9 {offsets = [0, 0], sizes = [16, 16], strides = [1, 1]} : vector<16x64xf32> to vector<16x16xf32>
    %13 = vector.extract_strided_slice %10 {offsets = [0, 0], sizes = [16, 16], strides = [1, 1]} : vector<16x64xf32> to vector<16x16xf32>
    "tpu.trace_start"() <{level = 10 : i32, message = "qd,kd->qk"}> : () -> ()
    %cst_9 = arith.constant dense<0.000000e+00> : vector<8x16xf32>
    %14 = tpu.matmul %11, %12, %cst_9 {dimension_numbers = #tpu.dot_dimension_numbers<[1], [1], [0], [0], [0, 0, 1, 0], [], []>} : vector<8x16xf32>, vector<16x16xf32>, vector<8x16xf32> -> vector<8x16xf32>
    "tpu.trace_stop"() : () -> ()
    %cst_10 = arith.constant dense<0xFF800000> : vector<8xf32>
    %15 = vector.multi_reduction <maximumf>, %14, %cst_10 [1] : vector<8x16xf32> to vector<8xf32>
    %16 = vector.shape_cast %15 : vector<8xf32> to vector<8x1xf32>
    %17 = vector.broadcast %16 : vector<8x1xf32> to vector<8x16xf32>
    %18 = arith.subf %14, %17 : vector<8x16xf32>
    %19 = math.exp %18 : vector<8x16xf32>
    %cst_11 = arith.constant dense<0.000000e+00> : vector<8xf32>
    %20 = vector.multi_reduction <add>, %19, %cst_11 [1] : vector<8x16xf32> to vector<8xf32>
    %21 = vector.shape_cast %20 : vector<8xf32> to vector<8x1xf32>
    %22 = tpu.reciprocal %21 : vector<8x1xf32> -> vector<8x1xf32>
    %23 = vector.broadcast %22 : vector<8x1xf32> to vector<8x16xf32>
    %24 = arith.mulf %19, %23 : vector<8x16xf32>
    %cst_12 = arith.constant dense<0.000000e+00> : vector<8x16xf32>
    %25 = tpu.matmul %24, %13, %cst_12 {dimension_numbers = #tpu.dot_dimension_numbers<[1], [0], [0], [1], [0, 0, 1, 1], [], []>} : vector<8x16xf32>, vector<16x16xf32>, vector<8x16xf32> -> vector<8x16xf32>
    %26 = vector.extract_strided_slice %8 {offsets = [0, 16], sizes = [8, 16], strides = [1, 1]} : vector<8x64xf32> to vector<8x16xf32>
    %27 = vector.extract_strided_slice %9 {offsets = [0, 16], sizes = [16, 16], strides = [1, 1]} : vector<16x64xf32> to vector<16x16xf32>
    %28 = vector.extract_strided_slice %10 {offsets = [0, 16], sizes = [16, 16], strides = [1, 1]} : vector<16x64xf32> to vector<16x16xf32>
    "tpu.trace_start"() <{level = 10 : i32, message = "qd,kd->qk"}> : () -> ()
    %cst_13 = arith.constant dense<0.000000e+00> : vector<8x16xf32>
    %29 = tpu.matmul %26, %27, %cst_13 {dimension_numbers = #tpu.dot_dimension_numbers<[1], [1], [0], [0], [0, 0, 1, 0], [], []>} : vector<8x16xf32>, vector<16x16xf32>, vector<8x16xf32> -> vector<8x16xf32>
    "tpu.trace_stop"() : () -> ()
    %cst_14 = arith.constant dense<0xFF800000> : vector<8xf32>
    %30 = vector.multi_reduction <maximumf>, %29, %cst_14 [1] : vector<8x16xf32> to vector<8xf32>
    %31 = vector.shape_cast %30 : vector<8xf32> to vector<8x1xf32>
    %32 = vector.broadcast %31 : vector<8x1xf32> to vector<8x16xf32>
    %33 = arith.subf %29, %32 : vector<8x16xf32>
    %34 = math.exp %33 : vector<8x16xf32>
    %cst_15 = arith.constant dense<0.000000e+00> : vector<8xf32>
    %35 = vector.multi_reduction <add>, %34, %cst_15 [1] : vector<8x16xf32> to vector<8xf32>
    %36 = vector.shape_cast %35 : vector<8xf32> to vector<8x1xf32>
    %37 = tpu.reciprocal %36 : vector<8x1xf32> -> vector<8x1xf32>
    %38 = vector.broadcast %37 : vector<8x1xf32> to vector<8x16xf32>
    %39 = arith.mulf %34, %38 : vector<8x16xf32>
    %cst_16 = arith.constant dense<0.000000e+00> : vector<8x16xf32>
    %40 = tpu.matmul %39, %28, %cst_16 {dimension_numbers = #tpu.dot_dimension_numbers<[1], [0], [0], [1], [0, 0, 1, 1], [], []>} : vector<8x16xf32>, vector<16x16xf32>, vector<8x16xf32> -> vector<8x16xf32>
    %41 = vector.extract_strided_slice %8 {offsets = [0, 32], sizes = [8, 16], strides = [1, 1]} : vector<8x64xf32> to vector<8x16xf32>
    %42 = vector.extract_strided_slice %9 {offsets = [0, 32], sizes = [16, 16], strides = [1, 1]} : vector<16x64xf32> to vector<16x16xf32>
    %43 = vector.extract_strided_slice %10 {offsets = [0, 32], sizes = [16, 16], strides = [1, 1]} : vector<16x64xf32> to vector<16x16xf32>
    "tpu.trace_start"() <{level = 10 : i32, message = "qd,kd->qk"}> : () -> ()
    %cst_17 = arith.constant dense<0.000000e+00> : vector<8x16xf32>
    %44 = tpu.matmul %41, %42, %cst_17 {dimension_numbers = #tpu.dot_dimension_numbers<[1], [1], [0], [0], [0, 0, 1, 0], [], []>} : vector<8x16xf32>, vector<16x16xf32>, vector<8x16xf32> -> vector<8x16xf32>
    "tpu.trace_stop"() : () -> ()
    %cst_18 = arith.constant dense<0xFF800000> : vector<8xf32>
    %45 = vector.multi_reduction <maximumf>, %44, %cst_18 [1] : vector<8x16xf32> to vector<8xf32>
    %46 = vector.shape_cast %45 : vector<8xf32> to vector<8x1xf32>
    %47 = vector.broadcast %46 : vector<8x1xf32> to vector<8x16xf32>
    %48 = arith.subf %44, %47 : vector<8x16xf32>
    %49 = math.exp %48 : vector<8x16xf32>
    %cst_19 = arith.constant dense<0.000000e+00> : vector<8xf32>
    %50 = vector.multi_reduction <add>, %49, %cst_19 [1] : vector<8x16xf32> to vector<8xf32>
    %51 = vector.shape_cast %50 : vector<8xf32> to vector<8x1xf32>
    %52 = tpu.reciprocal %51 : vector<8x1xf32> -> vector<8x1xf32>
    %53 = vector.broadcast %52 : vector<8x1xf32> to vector<8x16xf32>
    %54 = arith.mulf %49, %53 : vector<8x16xf32>
    %cst_20 = arith.constant dense<0.000000e+00> : vector<8x16xf32>
    %55 = tpu.matmul %54, %43, %cst_20 {dimension_numbers = #tpu.dot_dimension_numbers<[1], [0], [0], [1], [0, 0, 1, 1], [], []>} : vector<8x16xf32>, vector<16x16xf32>, vector<8x16xf32> -> vector<8x16xf32>
    %56 = vector.extract_strided_slice %8 {offsets = [0, 48], sizes = [8, 16], strides = [1, 1]} : vector<8x64xf32> to vector<8x16xf32>
    %57 = vector.extract_strided_slice %9 {offsets = [0, 48], sizes = [16, 16], strides = [1, 1]} : vector<16x64xf32> to vector<16x16xf32>
    %58 = vector.extract_strided_slice %10 {offsets = [0, 48], sizes = [16, 16], strides = [1, 1]} : vector<16x64xf32> to vector<16x16xf32>
    "tpu.trace_start"() <{level = 10 : i32, message = "qd,kd->qk"}> : () -> ()
    %cst_21 = arith.constant dense<0.000000e+00> : vector<8x16xf32>
    %59 = tpu.matmul %56, %57, %cst_21 {dimension_numbers = #tpu.dot_dimension_numbers<[1], [1], [0], [0], [0, 0, 1, 0], [], []>} : vector<8x16xf32>, vector<16x16xf32>, vector<8x16xf32> -> vector<8x16xf32>
    "tpu.trace_stop"() : () -> ()
    %cst_22 = arith.constant dense<0xFF800000> : vector<8xf32>
    %60 = vector.multi_reduction <maximumf>, %59, %cst_22 [1] : vector<8x16xf32> to vector<8xf32>
    %61 = vector.shape_cast %60 : vector<8xf32> to vector<8x1xf32>
    %62 = vector.broadcast %61 : vector<8x1xf32> to vector<8x16xf32>
    %63 = arith.subf %59, %62 : vector<8x16xf32>
    %64 = math.exp %63 : vector<8x16xf32>
    %cst_23 = arith.constant dense<0.000000e+00> : vector<8xf32>
    %65 = vector.multi_reduction <add>, %64, %cst_23 [1] : vector<8x16xf32> to vector<8xf32>
    %66 = vector.shape_cast %65 : vector<8xf32> to vector<8x1xf32>
    %67 = tpu.reciprocal %66 : vector<8x1xf32> -> vector<8x1xf32>
    %68 = vector.broadcast %67 : vector<8x1xf32> to vector<8x16xf32>
    %69 = arith.mulf %64, %68 : vector<8x16xf32>
    %cst_24 = arith.constant dense<0.000000e+00> : vector<8x16xf32>
    %70 = tpu.matmul %69, %58, %cst_24 {dimension_numbers = #tpu.dot_dimension_numbers<[1], [0], [0], [1], [0, 0, 1, 1], [], []>} : vector<8x16xf32>, vector<16x16xf32>, vector<8x16xf32> -> vector<8x16xf32>
    %71 = tpu.concatenate %25, %40, %55, %70 in 1 : vector<8x16xf32>, vector<8x16xf32>, vector<8x16xf32>, vector<8x16xf32> -> vector<8x64xf32>
    %c0_25 = arith.constant 0 : index
    %c0_26 = arith.constant 0 : index
    %72 = vector.load %arg6[%c0_25, %c0_26] : memref<64x128xf32, #tpu.memory_space<vmem>>, vector<64x128xf32>
    %cst_27 = arith.constant dense<0.000000e+00> : vector<8x128xf32>
    %73 = tpu.matmul %71, %72, %cst_27 {dimension_numbers = #tpu.dot_dimension_numbers<[1], [0], [0], [1], [0, 0, 1, 1], [], []>} : vector<8x64xf32>, vector<64x128xf32>, vector<8x128xf32> -> vector<8x128xf32>
    %74 = arith.addf %4, %73 : vector<8x128xf32>
    %cst_28 = arith.constant dense<0.000000e+00> : vector<8xf32>
    %75 = vector.multi_reduction <add>, %74, %cst_28 [1] : vector<8x128xf32> to vector<8xf32>
    %76 = vector.shape_cast %75 : vector<8xf32> to vector<8x1xf32>
    %cst_29 = arith.constant 1.280000e+02 : f32
    %77 = vector.broadcast %cst_29 : f32 to vector<8x1xf32>
    %78 = arith.divf %76, %77 : vector<8x1xf32>
    %79 = vector.broadcast %78 : vector<8x1xf32> to vector<8x128xf32>
    %80 = arith.subf %74, %79 : vector<8x128xf32>
    %81 = vector.broadcast %78 : vector<8x1xf32> to vector<8x128xf32>
    %82 = arith.subf %74, %81 : vector<8x128xf32>
    %83 = arith.mulf %80, %82 : vector<8x128xf32>
    %cst_30 = arith.constant dense<0.000000e+00> : vector<8xf32>
    %84 = vector.multi_reduction <add>, %83, %cst_30 [1] : vector<8x128xf32> to vector<8xf32>
    %85 = vector.shape_cast %84 : vector<8xf32> to vector<8x1xf32>
    %cst_31 = arith.constant 1.280000e+02 : f32
    %86 = vector.broadcast %cst_31 : f32 to vector<8x1xf32>
    %87 = arith.divf %85, %86 : vector<8x1xf32>
    %88 = vector.broadcast %78 : vector<8x1xf32> to vector<8x128xf32>
    %89 = arith.subf %74, %88 : vector<8x128xf32>
    %cst_32 = arith.constant 9.99999974E-6 : f32
    %90 = vector.broadcast %cst_32 : f32 to vector<8x1xf32>
    %91 = arith.addf %87, %90 : vector<8x1xf32>
    %92 = math.rsqrt %91 : vector<8x1xf32>
    %93 = vector.broadcast %92 : vector<8x1xf32> to vector<8x128xf32>
    %94 = arith.mulf %89, %93 : vector<8x128xf32>
    %c0_33 = arith.constant 0 : index
    %c0_34 = arith.constant 0 : index
    %95 = vector.load %arg7[%c0_33, %c0_34] : memref<1x128xf32, #tpu.memory_space<vmem>>, vector<1x128xf32>
    %96 = vector.broadcast %95 : vector<1x128xf32> to vector<8x128xf32>
    %97 = arith.mulf %94, %96 : vector<8x128xf32>
    %c0_35 = arith.constant 0 : index
    %c0_36 = arith.constant 0 : index
    %98 = vector.load %arg8[%c0_35, %c0_36] : memref<1x128xf32, #tpu.memory_space<vmem>>, vector<1x128xf32>
    %99 = vector.broadcast %98 : vector<1x128xf32> to vector<8x128xf32>
    %100 = arith.addf %97, %99 : vector<8x128xf32>
    %c0_37 = arith.constant 0 : index
    %c0_38 = arith.constant 0 : index
    %c0_39 = arith.constant 0 : index
    %101 = vector.load %arg9[%c0_37, %c0_38, %c0_39] : memref<1x8x128xf32, #tpu.memory_space<vmem>>, vector<1x8x128xf32>
    %102 = vector.shape_cast %101 : vector<1x8x128xf32> to vector<8x128xf32>
    %103 = vector.shape_cast %100 : vector<8x128xf32> to vector<1x8x128xf32>
    tpu.vector_store %arg9[%c0_37, %c0_38, %c0_39], %103 {strides = array<i32>} : memref<1x8x128xf32, #tpu.memory_space<vmem>>, vector<1x8x128xf32>,
    return
  }
  func.func @transform_0(%arg0: i32, %arg1: i32) -> (i32, i32, i32) {
    %c0_i32 = arith.constant 0 : i32
    %c0_i32_0 = arith.constant 0 : i32
    return %arg0, %arg1, %c0_i32 : i32, i32, i32
  }
  func.func @transform_1(%arg0: i32, %arg1: i32) -> (i32, i32, i32) {
    %c0_i32 = arith.constant 0 : i32
    %c0_i32_0 = arith.constant 0 : i32
    %c0_i32_1 = arith.constant 0 : i32
    return %arg0, %c0_i32, %c0_i32_0 : i32, i32, i32
  }
  func.func @transform_2(%arg0: i32, %arg1: i32) -> (i32, i32) {
    %c0_i32 = arith.constant 0 : i32
    %c0_i32_0 = arith.constant 0 : i32
    %c0_i32_1 = arith.constant 0 : i32
    return %c0_i32, %c0_i32_0 : i32, i32
  }
  func.func @transform_3(%arg0: i32, %arg1: i32) -> (i32, i32) {
    %c0_i32 = arith.constant 0 : i32
    %c0_i32_0 = arith.constant 0 : i32
    %c0_i32_1 = arith.constant 0 : i32
    return %c0_i32, %c0_i32_0 : i32, i32
  }
  func.func @transform_4(%arg0: i32, %arg1: i32) -> (i32, i32) {
    %c0_i32 = arith.constant 0 : i32
    %c0_i32_0 = arith.constant 0 : i32
    %c0_i32_1 = arith.constant 0 : i32
    return %c0_i32, %c0_i32_0 : i32, i32
  }
  func.func @transform_5(%arg0: i32, %arg1: i32) -> (i32, i32) {
    %c0_i32 = arith.constant 0 : i32
    %c0_i32_0 = arith.constant 0 : i32
    %c0_i32_1 = arith.constant 0 : i32
    return %c0_i32, %c0_i32_0 : i32, i32
  }
  func.func @transform_6(%arg0: i32, %arg1: i32) -> (i32, i32) {
    %c0_i32 = arith.constant 0 : i32
    %c0_i32_0 = arith.constant 0 : i32
    %c0_i32_1 = arith.constant 0 : i32
    return %c0_i32, %c0_i32_0 : i32, i32
  }
  func.func @transform_7(%arg0: i32, %arg1: i32) -> (i32, i32, i32) {
    %c0_i32 = arith.constant 0 : i32
    %c0_i32_0 = arith.constant 0 : i32
    return %arg0, %arg1, %c0_i32 : i32, i32, i32
  }
}

</mosaic_0001>

<llo_original>
// kernel: tpu_custom_call.1
$region0: #{tpu_custom_call.1}
  #allocation0 [shape = 'u32[]', space=smem, size = 0x4, offset = 0x4, fixed_abs, tag = 'smem constant byte address 0x4 - core index']
  #allocation1 [shape = 'u32[72,128]{1,0:T(1,128)}', space=vmem, size = 0x9000, scoped, tag = 'internal scratch']
  #allocation2 [shape = 'f32[16,128]{1,0:T(8,128)}', space=vmem, size = 0x2000, scoped, tag = 'scratch operand']
  %s0 = inlined_call_operand.hbm [shape: f32[2,16,128], index: 0, kind: input, shape index: {}]
  %s1 = inlined_call_operand.hbm [shape: f32[2,16,128], index: 1, kind: input, shape index: {}]
  %s2 = inlined_call_operand.vmem [shape: f32[128,64], index: 2, kind: input, shape index: {}]
  %s3 = inlined_call_operand.vmem [shape: f32[128,128], index: 3, kind: input, shape index: {}]
  %s4 = inlined_call_operand.vmem [shape: f32[64,128], index: 4, kind: input, shape index: {}]
  %s5 = inlined_call_operand.vmem [shape: f32[1,128], index: 5, kind: input, shape index: {}]
  %s6 = inlined_call_operand.vmem [shape: f32[1,128], index: 6, kind: input, shape index: {}]
  %s7 = inlined_call_operand.hbm [shape: f32[2,16,128], index: 7, kind: output, shape index: {}]
  %s8 = sld [smem:[#allocation0]]
  $region73: #{tpu_custom_call.1} parent=0
    _
  %s10 = ssub.s32 1, %s8
  %s11 = scalar_select 0, %s10, %s8
  $region1: #{tpu_custom_call.1} parent=0
    #allocation3 [shape = 'u8[8192]{0}', space=vmem, size = 0x2000, scoped, tag = 'input window, operand 0']
    #allocation4 [shape = 's32[2]{0}', space=sflag, size = 0x8, scoped, tag = 'scoped memory for tpu_custom_call.1']
    #allocation5 [shape = 's32[2]{0}', space=sflag, size = 0x8, scoped, tag = 'scoped memory for tpu_custom_call.1']
    #allocation6 [shape = 'u8[16384]{0}', space=vmem, size = 0x4000, scoped, tag = 'input window, operand 1']
    #allocation7 [shape = 's32[2]{0}', space=sflag, size = 0x8, scoped, tag = 'scoped memory for tpu_custom_call.1']
    #allocation8 [shape = 'u8[8192]{0}', space=vmem, size = 0x2000, scoped, tag = 'output window, operand 0']
    %12 = vsyncpa [#allocation4], 0
    %s13 = scalar_lea.sflag [#allocation4], 1
    %14 = vsyncpa %s13, 0
    %15 = vsyncpa [#allocation7], 0
    %s16 = scalar_lea.sflag [#allocation7], 1
    %17 = vsyncpa %s16, 0
    %18 = vsyncpa [#allocation5], 0
    %s19 = scalar_lea.sflag [#allocation5], 1
    %20 = vsyncpa %s19, 0
    loop: start=0, step=1, limit=6
    $region2: #{tpu_custom_call.1} parent=1 // loop_pre_header
      _
    $region3: #{tpu_custom_call.1} parent=1 // loop_header
      %s22 = sphi 0, %s26
      %p23 = scmp.ge.s32.totalorder %s22, 6
      %s29 = sphi 0, %s41
      %s30 = sphi 0, %s37
      %s31 = sphi 0, %s29
      %s32 = sphi 0, %s30
      %s33 = sphi 0, %s31
      %s34 = sphi 0, %s32
      %s46 = sphi 0, %s48
      %s49 = sphi 0, %s46
      %s50 = sphi 0, %s49
      %s66 = sphi 0, %s50
      %s72 = sphi 0, %s74
      %s75 = sphi 0, %s72
      %s76 = sphi 0, %s75
      %s92 = sphi 0, %s76
      %s96 = sphi 0, %s96
      %s98 = sphi 0, %s96
      %s99 = sphi 0, %s98
      %s113 = sphi 0, %s99
      %s117 = sphi 0, %s117
      %s119 = sphi 0, %s117
      %s120 = sphi 0, %s119
      %s134 = sphi 0, %s120
      %s138 = sphi 0, %s138
      %s140 = sphi 0, %s138
      %s141 = sphi 0, %s140
      %s155 = sphi 0, %s141
      %s159 = sphi 0, %s159
      %s161 = sphi 0, %s159
      %s162 = sphi 0, %s161
      %s176 = sphi 0, %s162
      %s180 = sphi 0, %s180
      %s182 = sphi 0, %s180
      %s183 = sphi 0, %s182
      %s197 = sphi 0, %s183
      %s205 = sphi 0, %s207
      %s208 = sphi 0, %s205
      %s209 = sphi 0, %s208
      %s225 = sphi 0, %s209
    $region4: #{tpu_custom_call.1} parent=1 // loop_header_branch
      %25 = sbr.rel (%p23) target = $region8
    $region5: #{tpu_custom_call.1} parent=1 // loop_body
      %s27 = ssub.s32 %s22, 1
      %s28 = ssub.s32 %s22, 2
      %s35 = sadd.s32 1, %s30
      %p36 = scmp.ge.s32.totalorder %s35, 2
      %s37 = scalar_select %p36, 0, %s35
      %s38 = sadd.s32 1, %s29
      %s39 = scalar_select %p36, %s38, %s29
      %p40 = scmp.ge.s32.totalorder %s39, 2
      %s41 = scalar_select %p40, 0, %s39
      %s42 = ssub.s32 %s29, %s41
      %s43 = ssub.s32 %s30, %s37
      %s44 = sor.u32 %s42, %s43
      %p45 = scmp.eq.s32.totalorder %s44, 0
      %s47 = sadd.s32 %s46, 1
      %s48 = scalar_select %p45, %s46, %s47
      %p51 = pneg %p45
      %p52 = scmp.eq.s32.totalorder %s22, 3
      %p53 = por %p51, %p52
      %p54 = scmp.ne.s32.totalorder %s46, %s49
      %p55 = scmp.eq.s32.totalorder %s22, 0
      %p56 = por %p54, %p55
      %p57 = scmp.ne.s32.totalorder %s46, %s49
      %p58 = scmp.eq.s32.totalorder %s27, 3
      %p59 = por %p57, %p58
      %p60 = scmp.ne.s32.totalorder %s49, %s50
      %p61 = scmp.eq.s32.totalorder %s27, 0
      %p62 = por %p60, %p61
      %p63 = scmp.ne.s32.totalorder %s49, %s50
      %p64 = scmp.eq.s32.totalorder %s28, 3
      %p65 = por %p63, %p64
      %p67 = scmp.ne.s32.totalorder %s50, %s66
      %p68 = scmp.eq.s32.totalorder %s28, 0
      %p69 = por %p67, %p68
      %s70 = ssub.s32 %s29, %s41
      %p71 = scmp.eq.s32.totalorder %s70, 0
      %s73 = sadd.s32 %s72, 1
      %s74 = scalar_select %p71, %s72, %s73
      %p77 = pneg %p71
      %p78 = scmp.eq.s32.totalorder %s22, 3
      %p79 = por %p77, %p78
      %p80 = scmp.ne.s32.totalorder %s72, %s75
      %p81 = scmp.eq.s32.totalorder %s22, 0
      %p82 = por %p80, %p81
      %p83 = scmp.ne.s32.totalorder %s72, %s75
      %p84 = scmp.eq.s32.totalorder %s27, 3
      %p85 = por %p83, %p84
      %p86 = scmp.ne.s32.totalorder %s75, %s76
      %p87 = scmp.eq.s32.totalorder %s27, 0
      %p88 = por %p86, %p87
      %p89 = scmp.ne.s32.totalorder %s75, %s76
      %p90 = scmp.eq.s32.totalorder %s28, 3
      %p91 = por %p89, %p90
      %p93 = scmp.ne.s32.totalorder %s76, %s92
      %p94 = scmp.eq.s32.totalorder %s28, 0
      %p95 = por %p93, %p94
      %s97 = sadd.s32 %s96, 1
      %p100 = scmp.eq.s32.totalorder %s22, 3
      %p101 = scmp.ne.s32.totalorder %s96, %s98
      %p102 = scmp.eq.s32.totalorder %s22, 0
      %p103 = por %p101, %p102
      %p104 = scmp.ne.s32.totalorder %s96, %s98
      %p105 = scmp.eq.s32.totalorder %s27, 3
      %p106 = por %p104, %p105
      %p107 = scmp.ne.s32.totalorder %s98, %s99
      %p108 = scmp.eq.s32.totalorder %s27, 0
      %p109 = por %p107, %p108
      %p110 = scmp.ne.s32.totalorder %s98, %s99
      %p111 = scmp.eq.s32.totalorder %s28, 3
      %p112 = por %p110, %p111
      %p114 = scmp.ne.s32.totalorder %s99, %s113
      %p115 = scmp.eq.s32.totalorder %s28, 0
      %p116 = por %p114, %p115
      %s118 = sadd.s32 %s117, 1
      %p121 = scmp.eq.s32.totalorder %s22, 3
      %p122 = scmp.ne.s32.totalorder %s117, %s119
      %p123 = scmp.eq.s32.totalorder %s22, 0
      %p124 = por %p122, %p123
      %p125 = scmp.ne.s32.totalorder %s117, %s119
      %p126 = scmp.eq.s32.totalorder %s27, 3
      %p127 = por %p125, %p126
      %p128 = scmp.ne.s32.totalorder %s119, %s120
      %p129 = scmp.eq.s32.totalorder %s27, 0
      %p130 = por %p128, %p129
      %p131 = scmp.ne.s32.totalorder %s119, %s120
      %p132 = scmp.eq.s32.totalorder %s28, 3
      %p133 = por %p131, %p132
      %p135 = scmp.ne.s32.totalorder %s120, %s134
      %p136 = scmp.eq.s32.totalorder %s28, 0
      %p137 = por %p135, %p136
      %s139 = sadd.s32 %s138, 1
      %p142 = scmp.eq.s32.totalorder %s22, 3
      %p143 = scmp.ne.s32.totalorder %s138, %s140
      %p144 = scmp.eq.s32.totalorder %s22, 0
      %p145 = por %p143, %p144
      %p146 = scmp.ne.s32.totalorder %s138, %s140
      %p147 = scmp.eq.s32.totalorder %s27, 3
      %p148 = por %p146, %p147
      %p149 = scmp.ne.s32.totalorder %s140, %s141
      %p150 = scmp.eq.s32.totalorder %s27, 0
      %p151 = por %p149, %p150
      %p152 = scmp.ne.s32.totalorder %s140, %s141
      %p153 = scmp.eq.s32.totalorder %s28, 3
      %p154 = por %p152, %p153
      %p156 = scmp.ne.s32.totalorder %s141, %s155
      %p157 = scmp.eq.s32.totalorder %s28, 0
      %p158 = por %p156, %p157
      %s160 = sadd.s32 %s159, 1
      %p163 = scmp.eq.s32.totalorder %s22, 3
      %p164 = scmp.ne.s32.totalorder %s159, %s161
      %p165 = scmp.eq.s32.totalorder %s22, 0
      %p166 = por %p164, %p165
      %p167 = scmp.ne.s32.totalorder %s159, %s161
      %p168 = scmp.eq.s32.totalorder %s27, 3
      %p169 = por %p167, %p168
      %p170 = scmp.ne.s32.totalorder %s161, %s162
      %p171 = scmp.eq.s32.totalorder %s27, 0
      %p172 = por %p170, %p171
      %p173 = scmp.ne.s32.totalorder %s161, %s162
      %p174 = scmp.eq.s32.totalorder %s28, 3
      %p175 = por %p173, %p174
      %p177 = scmp.ne.s32.totalorder %s162, %s176
      %p178 = scmp.eq.s32.totalorder %s28, 0
      %p179 = por %p177, %p178
      %s181 = sadd.s32 %s180, 1
      %p184 = scmp.eq.s32.totalorder %s22, 3
      %p185 = scmp.ne.s32.totalorder %s180, %s182
      %p186 = scmp.eq.s32.totalorder %s22, 0
      %p187 = por %p185, %p186
      %p188 = scmp.ne.s32.totalorder %s180, %s182
      %p189 = scmp.eq.s32.totalorder %s27, 3
      %p190 = por %p188, %p189
      %p191 = scmp.ne.s32.totalorder %s182, %s183
      %p192 = scmp.eq.s32.totalorder %s27, 0
      %p193 = por %p191, %p192
      %p194 = scmp.ne.s32.totalorder %s182, %s183
      %p195 = scmp.eq.s32.totalorder %s28, 3
      %p196 = por %p194, %p195
      %p198 = scmp.ne.s32.totalorder %s183, %s197
      %p199 = scmp.eq.s32.totalorder %s28, 0
      %p200 = por %p198, %p199
      %s201 = ssub.s32 %s29, %s41
      %s202 = ssub.s32 %s30, %s37
      %s203 = sor.u32 %s201, %s202
      %p204 = scmp.eq.s32.totalorder %s203, 0
      %s206 = sadd.s32 %s205, 1
      %s207 = scalar_select %p204, %s205, %s206
      %p210 = pneg %p204
      %p211 = scmp.eq.s32.totalorder %s22, 3
      %p212 = por %p210, %p211
      %p213 = scmp.ne.s32.totalorder %s205, %s208
      %p214 = scmp.eq.s32.totalorder %s22, 0
      %p215 = por %p213, %p214
      %p216 = scmp.ne.s32.totalorder %s205, %s208
      %p217 = scmp.eq.s32.totalorder %s27, 3
      %p218 = por %p216, %p217
      %p219 = scmp.ne.s32.totalorder %s208, %s209
      %p220 = scmp.eq.s32.totalorder %s27, 0
      %p221 = por %p219, %p220
      %p222 = scmp.ne.s32.totalorder %s208, %s209
      %p223 = scmp.eq.s32.totalorder %s28, 3
      %p224 = por %p222, %p223
      %p226 = scmp.ne.s32.totalorder %s209, %s225
      %p227 = scmp.eq.s32.totalorder %s28, 0
      %p228 = por %p226, %p227
      %p229 = scmp.le.s32.totalorder 1, %s22
      %p230 = scmp.lt.s32.totalorder %s22, 5
      %p231 = pnand %p229, %p230
      %p232 = pneg %p231
      // Predicated region
      $region9: #{tpu_custom_call.1} parent=5 // pred_check
        _
      $region10: #{tpu_custom_call.1} parent=5 // pred_check_branch
        %234 = sbr.rel (%p231) target = $region12
      $region11: #{tpu_custom_call.1} parent=5 // pred_region
        %s235 = ssub.s32 %s22, 1
        // Predicated region
        $region13: #{tpu_custom_call.1} parent=11 // pred_check
          %p236 = pneg %p109
        $region14: #{tpu_custom_call.1} parent=11 // pred_check_branch
          %238 = sbr.rel (%p236) target = $region16
        $region15: #{tpu_custom_call.1} parent=11 // pred_region
          _
        $region16: #{tpu_custom_call.1} parent=11 // pred_fallthru
          _
        // Predicated region
        $region17: #{tpu_custom_call.1} parent=11 // pred_check
          %p239 = pneg %p130
        $region18: #{tpu_custom_call.1} parent=11 // pred_check_branch
          %241 = sbr.rel (%p239) target = $region20
        $region19: #{tpu_custom_call.1} parent=11 // pred_region
          _
        $region20: #{tpu_custom_call.1} parent=11 // pred_fallthru
          _
        // Predicated region
        $region21: #{tpu_custom_call.1} parent=11 // pred_check
          %p242 = pneg %p151
        $region22: #{tpu_custom_call.1} parent=11 // pred_check_branch
          %244 = sbr.rel (%p242) target = $region24
        $region23: #{tpu_custom_call.1} parent=11 // pred_region
          _
        $region24: #{tpu_custom_call.1} parent=11 // pred_fallthru
          _
        // Predicated region
        $region25: #{tpu_custom_call.1} parent=11 // pred_check
          %p245 = pneg %p172
        $region26: #{tpu_custom_call.1} parent=11 // pred_check_branch
          %247 = sbr.rel (%p245) target = $region28
        $region27: #{tpu_custom_call.1} parent=11 // pred_region
          _
        $region28: #{tpu_custom_call.1} parent=11 // pred_fallthru
          _
        // Predicated region
        $region29: #{tpu_custom_call.1} parent=11 // pred_check
          %p248 = pneg %p193
        $region30: #{tpu_custom_call.1} parent=11 // pred_check_branch
          %250 = sbr.rel (%p248) target = $region32
        $region31: #{tpu_custom_call.1} parent=11 // pred_region
          _
        $region32: #{tpu_custom_call.1} parent=11 // pred_fallthru
          _
      $region12: #{tpu_custom_call.1} parent=5 // pred_fallthru
        _
      %p251 = scmp.lt.s32.totalorder %s22, 4
      // Predicated region
      $region33: #{tpu_custom_call.1} parent=5 // pred_check
        %p252 = pneg %p251
      $region34: #{tpu_custom_call.1} parent=5 // pred_check_branch
        %254 = sbr.rel (%p252) target = $region36
      $region35: #{tpu_custom_call.1} parent=5 // pred_region
        // Predicated region
        $region37: #{tpu_custom_call.1} parent=35 // pred_check
          %p255 = pneg %p56
        $region38: #{tpu_custom_call.1} parent=35 // pred_check_branch
          %257 = sbr.rel (%p255) target = $region40
        $region39: #{tpu_custom_call.1} parent=35 // pred_region
          %s258 = sand.u32 %s46, 1
          %s259 = scalar_lea.sflag [#allocation4], %s258
          %s260 = sand.u32 %s46, 1
          %s261 = smul.addr %s260, 8
          %s262 = scalar_lea.vmem [#allocation3], %s261
          %264 = vsyncadd %s259, 0
          %s265 = smul.addr %s29, 2
          %s266 = sadd.s32 %s30, %s265
          %s267 = smul.addr %s266, 8
          %s268 = scalar_lea.hbm %s0, %s267
          %s270 = sshll.u32 %s268, 4
          %s271 = int_to_ptr.hbm [resolvable:$true] %s270
          %s272 = sshll.u32 %s262, 4
          %s273 = int_to_ptr.vmem [resolvable:$true] %s272
          %275 = dma.hbm_to_vmem [thread:$0]  %s271, 128, %s273, %s259
        $region40: #{tpu_custom_call.1} parent=35 // pred_fallthru
          _
        // Predicated region
        $region41: #{tpu_custom_call.1} parent=35 // pred_check
          %p276 = pneg %p82
        $region42: #{tpu_custom_call.1} parent=35 // pred_check_branch
          %278 = sbr.rel (%p276) target = $region44
        $region43: #{tpu_custom_call.1} parent=35 // pred_region
          %s279 = sand.u32 %s72, 1
          %s280 = scalar_lea.sflag [#allocation7], %s279
          %s281 = sand.u32 %s72, 1
          %s282 = smul.addr %s281, 16
          %s283 = scalar_lea.vmem [#allocation6], %s282
          %285 = vsyncadd %s280, 0
          %s286 = smul.addr %s29, 2
          %s287 = smul.addr %s286, 8
          %s288 = scalar_lea.hbm %s1, %s287
          %s289 = sshll.u32 %s288, 4
          %s290 = int_to_ptr.hbm [resolvable:$true] %s289
          %s291 = sshll.u32 %s283, 4
          %s292 = int_to_ptr.vmem [resolvable:$true] %s291
          %297 = dma.hbm_to_vmem [thread:$0]  %s290, 256, %s292, %s280, 128, 128, 8
        $region44: #{tpu_custom_call.1} parent=35 // pred_fallthru
          _
      $region36: #{tpu_custom_call.1} parent=5 // pred_fallthru
        _
      %p298 = scmp.le.s32.totalorder 1, %s22
      %p299 = scmp.lt.s32.totalorder %s22, 5
      %p300 = pnand %p298, %p299
      %p301 = pneg %p300
      // Predicated region
      $region45: #{tpu_custom_call.1} parent=5 // pred_check
        _
      $region46: #{tpu_custom_call.1} parent=5 // pred_check_branch
        %303 = sbr.rel (%p300) target = $region48
      $region47: #{tpu_custom_call.1} parent=5 // pred_region
        %s304 = ssub.s32 %s22, 1
        %s305 = sand.u32 %s49, 1
        %s306 = scalar_lea.sflag [#allocation4], %s305
        %s307 = sand.u32 %s49, 1
        %s308 = smul.addr %s307, 8
        %s309 = scalar_lea.vmem [#allocation3], %s308
        // Predicated region
        $region49: #{tpu_custom_call.1} parent=47 // pred_check
          %p310 = pneg %p62
        $region50: #{tpu_custom_call.1} parent=47 // pred_check_branch
          %312 = sbr.rel (%p310) target = $region52
        $region51: #{tpu_custom_call.1} parent=47 // pred_region
          %314 = dma.done %s306, 128
        $region52: #{tpu_custom_call.1} parent=47 // pred_fallthru
          _
        %s315 = sand.u32 %s75, 1
        %s316 = scalar_lea.sflag [#allocation7], %s315
        %s317 = sand.u32 %s75, 1
        %s318 = smul.addr %s317, 16
        %s319 = scalar_lea.vmem [#allocation6], %s318
        // Predicated region
        $region53: #{tpu_custom_call.1} parent=47 // pred_check
          %p320 = pneg %p88
        $region54: #{tpu_custom_call.1} parent=47 // pred_check_branch
          %322 = sbr.rel (%p320) target = $region56
        $region55: #{tpu_custom_call.1} parent=47 // pred_region
          %324 = dma.done %s316, 256
        $region56: #{tpu_custom_call.1} parent=47 // pred_fallthru
          _
        %s325 = sand.u32 %s49, 1
        %s326 = scalar_lea.sflag [#allocation4], %s325
        %s327 = sand.u32 %s49, 1
        %s328 = smul.addr %s327, 8
        %s329 = scalar_lea.vmem [#allocation3], %s328
        %p330 = pneg %p62
        %p331 = pneg %p59
        %s332 = sand.u32 %s75, 1
        %s333 = scalar_lea.sflag [#allocation7], %s332
        %s334 = sand.u32 %s75, 1
        %s335 = smul.addr %s334, 16
        %s336 = scalar_lea.vmem [#allocation6], %s335
        %p337 = pneg %p88
        %p338 = pneg %p85
        %p339 = pneg %p109
        %p340 = pneg %p106
        %p341 = pneg %p130
        %p342 = pneg %p127
        %p343 = pneg %p151
        %p344 = pneg %p148
        %p345 = pneg %p172
        %p346 = pneg %p169
        %p347 = pneg %p193
        %p348 = pneg %p190
        %p349 = pneg %p221
        %p350 = pneg %p218
        %s351 = sand.u32 %s208, 1
        %s352 = scalar_lea.sflag [#allocation5], %s351
        %s353 = sand.u32 %s208, 1
        %s354 = smul.addr %s353, 8
        %s355 = scalar_lea.vmem [#allocation8], %s354
        %p356 = scmp.eq.s32.totalorder %s32, 0
        // Predicated region
        $region57: #{tpu_custom_call.1} parent=47 // pred_check
          %p357 = pneg %p356
        $region58: #{tpu_custom_call.1} parent=47 // pred_check_branch
          %359 = sbr.rel (%p357) target = $region60
        $region59: #{tpu_custom_call.1} parent=47 // pred_region
          %v360 = vld [vmem:[%s319] sm:$0xff]
          %v361 = vld [vmem:[%s319 + $0x8] sm:$0xff]
          %v362 = vld [vmem:[%s3] sm:$0xff]
          %v363 = vld [vmem:[%s3 + $0x8] sm:$0xff]
          %v364 = vld [vmem:[%s3 + $0x10] sm:$0xff]
          %v365 = vld [vmem:[%s3 + $0x18] sm:$0xff]
          %v366 = vld [vmem:[%s3 + $0x20] sm:$0xff]
          %v367 = vld [vmem:[%s3 + $0x28] sm:$0xff]
          %v368 = vld [vmem:[%s3 + $0x30] sm:$0xff]
          %v369 = vld [vmem:[%s3 + $0x38] sm:$0xff]
          %v370 = vld [vmem:[%s3 + $0x40] sm:$0xff]
          %v371 = vld [vmem:[%s3 + $0x48] sm:$0xff]
          %v372 = vld [vmem:[%s3 + $0x50] sm:$0xff]
          %v373 = vld [vmem:[%s3 + $0x58] sm:$0xff]
          %v374 = vld [vmem:[%s3 + $0x60] sm:$0xff]
          %v375 = vld [vmem:[%s3 + $0x68] sm:$0xff]
          %v376 = vld [vmem:[%s3 + $0x70] sm:$0xff]
          %v377 = vld [vmem:[%s3 + $0x78] sm:$0xff]
          %378 = vmatpush.msra.mxu0 %v377
          %379 = vmatpush.msra.mxu0 %v376
          %380 = vmatpush.msra.mxu0 %v375
          %381 = vmatpush.msra.mxu0 %v374
          %382 = vmatpush.msra.mxu0 %v373
          %383 = vmatpush.msra.mxu0 %v372
          %384 = vmatpush.msra.mxu0 %v371
          %385 = vmatpush.msra.mxu0 %v370
          %386 = vmatpush.msra.mxu0 %v369
          %387 = vmatpush.msra.mxu0 %v368
          %388 = vmatpush.msra.mxu0 %v367
          %389 = vmatpush.msra.mxu0 %v366
          %390 = vmatpush.msra.mxu0 %v365
          %391 = vmatpush.msra.mxu0 %v364
          %392 = vmatpush.msra.mxu0 %v363
          %393 = vmatpush.msra.mxu0 %v362
          %394 = vmatmul.f32.gmra.mxu0 %v360
          %v395 = vpop.f32.mrf.mxu0
          %v396 = vadd.f32 0.0, %v395
          %397 = vmatmul.f32.gmra.mxu0 %v361
          %v398 = vpop.f32.mrf.mxu0
          %v399 = vadd.f32 0.0, %v398
          %400 = vdwg.mxu0
          %401 = vst [vmem:[#allocation2] sm:$0xff] %v396
          %402 = vst [vmem:[#allocation2 + $0x8] sm:$0xff] %v399
        $region60: #{tpu_custom_call.1} parent=47 // pred_fallthru
          _
        %v403 = vld [vmem:[%s309] sm:$0xff]
        %v404 = vld [vmem:[%s2] sm:$0xff]
        %v405 = vld [vmem:[%s2 + $0x8] sm:$0xff]
        %v406 = vld [vmem:[%s2 + $0x10] sm:$0xff]
        %v407 = vld [vmem:[%s2 + $0x18] sm:$0xff]
        %v408 = vld [vmem:[%s2 + $0x20] sm:$0xff]
        %v409 = vld [vmem:[%s2 + $0x28] sm:$0xff]
        %v410 = vld [vmem:[%s2 + $0x30] sm:$0xff]
        %v411 = vld [vmem:[%s2 + $0x38] sm:$0xff]
        %v412 = vld [vmem:[%s2 + $0x40] sm:$0xff]
        %v413 = vld [vmem:[%s2 + $0x48] sm:$0xff]
        %v414 = vld [vmem:[%s2 + $0x50] sm:$0xff]
        %v415 = vld [vmem:[%s2 + $0x58] sm:$0xff]
        %v416 = vld [vmem:[%s2 + $0x60] sm:$0xff]
        %v417 = vld [vmem:[%s2 + $0x68] sm:$0xff]
        %v418 = vld [vmem:[%s2 + $0x70] sm:$0xff]
        %v419 = vld [vmem:[%s2 + $0x78] sm:$0xff]
        %420 = vmatpush.msra.mxu0 %v419
        %421 = vmatpush.msra.mxu0 %v418
        %422 = vmatpush.msra.mxu0 %v417
        %423 = vmatpush.msra.mxu0 %v416
        %424 = vmatpush.msra.mxu0 %v415
        %425 = vmatpush.msra.mxu0 %v414
        %426 = vmatpush.msra.mxu0 %v413
        %427 = vmatpush.msra.mxu0 %v412
        %428 = vmatpush.msra.mxu0 %v411
        %429 = vmatpush.msra.mxu0 %v410
        %430 = vmatpush.msra.mxu0 %v409
        %431 = vmatpush.msra.mxu0 %v408
        %432 = vmatpush.msra.mxu0 %v407
        %433 = vmatpush.msra.mxu0 %v406
        %434 = vmatpush.msra.mxu0 %v405
        %435 = vmatpush.msra.mxu0 %v404
        %436 = vmatmul.f32.gmra.mxu0 %v403
        %v437 = vpop.f32.mrf.mxu0
        %v438 = vadd.f32 0.0, %v437
        %439 = vdwg.mxu0
        %v440 = vmul.f32 %v438, 0.25
        %v441 = vld [vmem:[#allocation2] sm:$0xff]
        %v442 = vld [vmem:[#allocation2 + $0x8] sm:$0xff]
        %vm443 = vcmask 130048
        %v445 = vsel %vm443, %v440, 0
        %v448 = vsel %vm443, %v441, 0
        %v451 = vsel %vm443, %v442, 0
        %453 = vmatpush.xpose.msra.mxu0 0.0
        %454 = vmatpush.xpose.msra.mxu0 0.0
        %455 = vmatpush.xpose.msra.mxu0 0.0
        %456 = vmatpush.xpose.msra.mxu0 0.0
        %457 = vmatpush.xpose.msra.mxu0 0.0
        %458 = vmatpush.xpose.msra.mxu0 0.0
        %459 = vmatpush.xpose.msra.mxu0 0.0
        %460 = vmatpush.xpose.msra.mxu0 0.0
        %461 = vmatpush.xpose.msra.mxu0 0.0
        %462 = vmatpush.xpose.msra.mxu0 0.0
        %463 = vmatpush.xpose.msra.mxu0 0.0
        %464 = vmatpush.xpose.msra.mxu0 0.0
        %465 = vmatpush.xpose.msra.mxu0 0.0
        %466 = vmatpush.xpose.msra.mxu0 0.0
        %467 = vmatpush.xpose.msra.mxu0 %v451
        %468 = vmatpush.xpose.msra.mxu0 %v448
        %469 = vmatmul.f32.gmra.mxu0 %v445
        %v470 = vpop.f32.mrf.mxu0
        %v471 = vadd.f32 0.0, %v470
        %472 = vdwg.mxu0
        %v473 = vsel %vm443, %v471, -inf
        %474 = vmax.xlane.f32.xlu0 %v473
        %v475 = vpop.xlane.xlu0 %474
        %v476 = vsub.f32 %v471, %v475
        %v477 = vmul.f32 %v476, 1.442695
        %v478 = vpow.pop %v477
        %v479 = vsel %vm443, %v478, 0.0
        %480 = vadd.xlane.f32.xlu0 %v479
        %v481 = vpop.xlane.xlu0 %480
        %v482 = vrcp.pop %v481
        %v483 = vmul.f32 %v481, %v482
        %v484 = vsub.f32 1.0, %v483
        %v485 = vmul.f32 %v482, %v484
        %v486 = vadd.f32 %v482, %v485
        %vm487 = vweird.f32 %v481
        %vm488 = vweird.f32 %v482
        %vm489 = vmor %vm487, %vm488
        %v490 = vsel %vm489, %v482, %v486
        %v491 = vand.u32 2147483647, %v481
        %vm492 = vcmp.eq.f32.partialorder %v491, 8.507059e+37
        %v493 = vand.u32 %v481, 2147483648
        %v494 = vor.u32 1.1754944e-38, %v493
        %v495 = vsel %vm492, %v494, %v490
        %v496 = vmul.f32 %v478, %v495
        %497 = vrot.lane.b32.xlu0 %v441, 64
        %v498 = vpop.permute.xlu0 %497
        %499 = vrot.lane.b32.xlu0 %v442, 64
        %v500 = vpop.permute.xlu0 %499
        %v504 = vsel %vm443, %v496, 0
        %506 = vmatpush.msra.mxu0 0.0
        %507 = vmatpush.msra.mxu0 0.0
        %508 = vmatpush.msra.mxu0 0.0
        %509 = vmatpush.msra.mxu0 0.0
        %510 = vmatpush.msra.mxu0 0.0
        %511 = vmatpush.msra.mxu0 0.0
        %512 = vmatpush.msra.mxu0 0.0
        %513 = vmatpush.msra.mxu0 0.0
        %514 = vmatpush.msra.mxu0 0.0
        %515 = vmatpush.msra.mxu0 0.0
        %516 = vmatpush.msra.mxu0 0.0
        %517 = vmatpush.msra.mxu0 0.0
        %518 = vmatpush.msra.mxu0 0.0
        %519 = vmatpush.msra.mxu0 0.0
        %520 = vmatpush.msra.mxu0 %v500
        %521 = vmatpush.msra.mxu0 %v498
        %522 = vmatmul.f32.gmra.mxu0 %v504
        %v523 = vpop.f32.mrf.mxu0
        %v524 = vadd.f32 0.0, %v523
        %525 = vdwg.mxu0
        %526 = vrot.lane.b32.xlu0 %v440, 112
        %v527 = vpop.permute.xlu0 %526
        %528 = vrot.lane.b32.xlu0 %v441, 112
        %v529 = vpop.permute.xlu0 %528
        %530 = vrot.lane.b32.xlu0 %v442, 112
        %v531 = vpop.permute.xlu0 %530
        %v532 = vsel %vm443, %v527, 0
        %v534 = vsel %vm443, %v529, 0
        %v536 = vsel %vm443, %v531, 0
        %538 = vmatpush.xpose.msra.mxu0 0.0
        %539 = vmatpush.xpose.msra.mxu0 0.0
        %540 = vmatpush.xpose.msra.mxu0 0.0
        %541 = vmatpush.xpose.msra.mxu0 0.0
        %542 = vmatpush.xpose.msra.mxu0 0.0
        %543 = vmatpush.xpose.msra.mxu0 0.0
        %544 = vmatpush.xpose.msra.mxu0 0.0
        %545 = vmatpush.xpose.msra.mxu0 0.0
        %546 = vmatpush.xpose.msra.mxu0 0.0
        %547 = vmatpush.xpose.msra.mxu0 0.0
        %548 = vmatpush.xpose.msra.mxu0 0.0
        %549 = vmatpush.xpose.msra.mxu0 0.0
        %550 = vmatpush.xpose.msra.mxu0 0.0
        %551 = vmatpush.xpose.msra.mxu0 0.0
        %552 = vmatpush.xpose.msra.mxu0 %v536
        %553 = vmatpush.xpose.msra.mxu0 %v534
        %554 = vmatmul.f32.gmra.mxu0 %v532
        %v555 = vpop.f32.mrf.mxu0
        %v556 = vadd.f32 0.0, %v555
        %557 = vdwg.mxu0
        %v558 = vsel %vm443, %v556, -inf
        %559 = vmax.xlane.f32.xlu0 %v558
        %v560 = vpop.xlane.xlu0 %559
        %v561 = vsub.f32 %v556, %v560
        %v562 = vmul.f32 %v561, 1.442695
        %v563 = vpow.pop %v562
        %v564 = vsel %vm443, %v563, 0.0
        %565 = vadd.xlane.f32.xlu0 %v564
        %v566 = vpop.xlane.xlu0 %565
        %v567 = vrcp.pop %v566
        %v568 = vmul.f32 %v566, %v567
        %v569 = vsub.f32 1.0, %v568
        %v570 = vmul.f32 %v567, %v569
        %v571 = vadd.f32 %v567, %v570
        %vm572 = vweird.f32 %v566
        %vm573 = vweird.f32 %v567
        %vm574 = vmor %vm572, %vm573
        %v575 = vsel %vm574, %v567, %v571
        %v576 = vand.u32 2147483647, %v566
        %vm577 = vcmp.eq.f32.partialorder %v576, 8.507059e+37
        %v578 = vand.u32 %v566, 2147483648
        %v579 = vor.u32 1.1754944e-38, %v578
        %v580 = vsel %vm577, %v579, %v575
        %v581 = vmul.f32 %v563, %v580
        %582 = vrot.lane.b32.xlu0 %v441, 48
        %v583 = vpop.permute.xlu0 %582
        %584 = vrot.lane.b32.xlu0 %v442, 48
        %v585 = vpop.permute.xlu0 %584
        %v589 = vsel %vm443, %v581, 0
        %591 = vmatpush.msra.mxu0 0.0
        %592 = vmatpush.msra.mxu0 0.0
        %593 = vmatpush.msra.mxu0 0.0
        %594 = vmatpush.msra.mxu0 0.0
        %595 = vmatpush.msra.mxu0 0.0
        %596 = vmatpush.msra.mxu0 0.0
        %597 = vmatpush.msra.mxu0 0.0
        %598 = vmatpush.msra.mxu0 0.0
        %599 = vmatpush.msra.mxu0 0.0
        %600 = vmatpush.msra.mxu0 0.0
        %601 = vmatpush.msra.mxu0 0.0
        %602 = vmatpush.msra.mxu0 0.0
        %603 = vmatpush.msra.mxu0 0.0
        %604 = vmatpush.msra.mxu0 0.0
        %605 = vmatpush.msra.mxu0 %v585
        %606 = vmatpush.msra.mxu0 %v583
        %607 = vmatmul.f32.gmra.mxu0 %v589
        %v608 = vpop.f32.mrf.mxu0
        %v609 = vadd.f32 0.0, %v608
        %610 = vdwg.mxu0
        %611 = vrot.lane.b32.xlu0 %v440, 96
        %v612 = vpop.permute.xlu0 %611
        %613 = vrot.lane.b32.xlu0 %v441, 96
        %v614 = vpop.permute.xlu0 %613
        %615 = vrot.lane.b32.xlu0 %v442, 96
        %v616 = vpop.permute.xlu0 %615
        %v617 = vsel %vm443, %v612, 0
        %v619 = vsel %vm443, %v614, 0
        %v621 = vsel %vm443, %v616, 0
        %623 = vmatpush.xpose.msra.mxu0 0.0
        %624 = vmatpush.xpose.msra.mxu0 0.0
        %625 = vmatpush.xpose.msra.mxu0 0.0
        %626 = vmatpush.xpose.msra.mxu0 0.0
        %627 = vmatpush.xpose.msra.mxu0 0.0
        %628 = vmatpush.xpose.msra.mxu0 0.0
        %629 = vmatpush.xpose.msra.mxu0 0.0
        %630 = vmatpush.xpose.msra.mxu0 0.0
        %631 = vmatpush.xpose.msra.mxu0 0.0
        %632 = vmatpush.xpose.msra.mxu0 0.0
        %633 = vmatpush.xpose.msra.mxu0 0.0
        %634 = vmatpush.xpose.msra.mxu0 0.0
        %635 = vmatpush.xpose.msra.mxu0 0.0
        %636 = vmatpush.xpose.msra.mxu0 0.0
        %637 = vmatpush.xpose.msra.mxu0 %v621
        %638 = vmatpush.xpose.msra.mxu0 %v619
        %639 = vmatmul.f32.gmra.mxu0 %v617
        %v640 = vpop.f32.mrf.mxu0
        %v641 = vadd.f32 0.0, %v640
        %642 = vdwg.mxu0
        %v643 = vsel %vm443, %v641, -inf
        %644 = vmax.xlane.f32.xlu0 %v643
        %v645 = vpop.xlane.xlu0 %644
        %v646 = vsub.f32 %v641, %v645
        %v647 = vmul.f32 %v646, 1.442695
        %v648 = vpow.pop %v647
        %v649 = vsel %vm443, %v648, 0.0
        %650 = vadd.xlane.f32.xlu0 %v649
        %v651 = vpop.xlane.xlu0 %650
        %v652 = vrcp.pop %v651
        %v653 = vmul.f32 %v651, %v652
        %v654 = vsub.f32 1.0, %v653
        %v655 = vmul.f32 %v652, %v654
        %v656 = vadd.f32 %v652, %v655
        %vm657 = vweird.f32 %v651
        %vm658 = vweird.f32 %v652
        %vm659 = vmor %vm657, %vm658
        %v660 = vsel %vm659, %v652, %v656
        %v661 = vand.u32 2147483647, %v651
        %vm662 = vcmp.eq.f32.partialorder %v661, 8.507059e+37
        %v663 = vand.u32 %v651, 2147483648
        %v664 = vor.u32 1.1754944e-38, %v663
        %v665 = vsel %vm662, %v664, %v660
        %v666 = vmul.f32 %v648, %v665
        %667 = vrot.lane.b32.xlu0 %v441, 32
        %v668 = vpop.permute.xlu0 %667
        %669 = vrot.lane.b32.xlu0 %v442, 32
        %v670 = vpop.permute.xlu0 %669
        %v674 = vsel %vm443, %v666, 0
        %676 = vmatpush.msra.mxu0 0.0
        %677 = vmatpush.msra.mxu0 0.0
        %678 = vmatpush.msra.mxu0 0.0
        %679 = vmatpush.msra.mxu0 0.0
        %680 = vmatpush.msra.mxu0 0.0
        %681 = vmatpush.msra.mxu0 0.0
        %682 = vmatpush.msra.mxu0 0.0
        %683 = vmatpush.msra.mxu0 0.0
        %684 = vmatpush.msra.mxu0 0.0
        %685 = vmatpush.msra.mxu0 0.0
        %686 = vmatpush.msra.mxu0 0.0
        %687 = vmatpush.msra.mxu0 0.0
        %688 = vmatpush.msra.mxu0 0.0
        %689 = vmatpush.msra.mxu0 0.0
        %690 = vmatpush.msra.mxu0 %v670
        %691 = vmatpush.msra.mxu0 %v668
        %692 = vmatmul.f32.gmra.mxu0 %v674
        %v693 = vpop.f32.mrf.mxu0
        %v694 = vadd.f32 0.0, %v693
        %695 = vdwg.mxu0
        %696 = vrot.lane.b32.xlu0 %v440, 80
        %v697 = vpop.permute.xlu0 %696
        %698 = vrot.lane.b32.xlu0 %v441, 80
        %v699 = vpop.permute.xlu0 %698
        %700 = vrot.lane.b32.xlu0 %v442, 80
        %v701 = vpop.permute.xlu0 %700
        %v702 = vsel %vm443, %v697, 0
        %v704 = vsel %vm443, %v699, 0
        %v706 = vsel %vm443, %v701, 0
        %708 = vmatpush.xpose.msra.mxu0 0.0
        %709 = vmatpush.xpose.msra.mxu0 0.0
        %710 = vmatpush.xpose.msra.mxu0 0.0
        %711 = vmatpush.xpose.msra.mxu0 0.0
        %712 = vmatpush.xpose.msra.mxu0 0.0
        %713 = vmatpush.xpose.msra.mxu0 0.0
        %714 = vmatpush.xpose.msra.mxu0 0.0
        %715 = vmatpush.xpose.msra.mxu0 0.0
        %716 = vmatpush.xpose.msra.mxu0 0.0
        %717 = vmatpush.xpose.msra.mxu0 0.0
        %718 = vmatpush.xpose.msra.mxu0 0.0
        %719 = vmatpush.xpose.msra.mxu0 0.0
        %720 = vmatpush.xpose.msra.mxu0 0.0
        %721 = vmatpush.xpose.msra.mxu0 0.0
        %722 = vmatpush.xpose.msra.mxu0 %v706
        %723 = vmatpush.xpose.msra.mxu0 %v704
        %724 = vmatmul.f32.gmra.mxu0 %v702
        %v725 = vpop.f32.mrf.mxu0
        %v726 = vadd.f32 0.0, %v725
        %727 = vdwg.mxu0
        %v728 = vsel %vm443, %v726, -inf
        %729 = vmax.xlane.f32.xlu0 %v728
        %v730 = vpop.xlane.xlu0 %729
        %v731 = vsub.f32 %v726, %v730
        %v732 = vmul.f32 %v731, 1.442695
        %v733 = vpow.pop %v732
        %v734 = vsel %vm443, %v733, 0.0
        %735 = vadd.xlane.f32.xlu0 %v734
        %v736 = vpop.xlane.xlu0 %735
        %v737 = vrcp.pop %v736
        %v738 = vmul.f32 %v736, %v737
        %v739 = vsub.f32 1.0, %v738
        %v740 = vmul.f32 %v737, %v739
        %v741 = vadd.f32 %v737, %v740
        %vm742 = vweird.f32 %v736
        %vm743 = vweird.f32 %v737
        %vm744 = vmor %vm742, %vm743
        %v745 = vsel %vm744, %v737, %v741
        %v746 = vand.u32 2147483647, %v736
        %vm747 = vcmp.eq.f32.partialorder %v746, 8.507059e+37
        %v748 = vand.u32 %v736, 2147483648
        %v749 = vor.u32 1.1754944e-38, %v748
        %v750 = vsel %vm747, %v749, %v745
        %v751 = vmul.f32 %v733, %v750
        %752 = vrot.lane.b32.xlu0 %v441, 16
        %v753 = vpop.permute.xlu0 %752
        %754 = vrot.lane.b32.xlu0 %v442, 16
        %v755 = vpop.permute.xlu0 %754
        %v759 = vsel %vm443, %v751, 0
        %761 = vmatpush.msra.mxu0 0.0
        %762 = vmatpush.msra.mxu0 0.0
        %763 = vmatpush.msra.mxu0 0.0
        %764 = vmatpush.msra.mxu0 0.0
        %765 = vmatpush.msra.mxu0 0.0
        %766 = vmatpush.msra.mxu0 0.0
        %767 = vmatpush.msra.mxu0 0.0
        %768 = vmatpush.msra.mxu0 0.0
        %769 = vmatpush.msra.mxu0 0.0
        %770 = vmatpush.msra.mxu0 0.0
        %771 = vmatpush.msra.mxu0 0.0
        %772 = vmatpush.msra.mxu0 0.0
        %773 = vmatpush.msra.mxu0 0.0
        %774 = vmatpush.msra.mxu0 0.0
        %775 = vmatpush.msra.mxu0 %v755
        %776 = vmatpush.msra.mxu0 %v753
        %777 = vmatmul.f32.gmra.mxu0 %v759
        %v778 = vpop.f32.mrf.mxu0
        %v779 = vadd.f32 0.0, %v778
        %780 = vdwg.mxu0
        %782 = vrot.lane.b32.xlu0 %v609, 16
        %v783 = vpop.permute.xlu0 %782
        %786 = vrot.lane.b32.xlu0 %v694, 32
        %v787 = vpop.permute.xlu0 %786
        %790 = vrot.lane.b32.xlu0 %v779, 48
        %v791 = vpop.permute.xlu0 %790
        %v793 = vsel %vm443, %v524, %v783
        %vm794 = vcmask 261120
        %v795 = vsel %vm794, %v793, %v787
        %vm796 = vcmask 392192
        %v797 = vsel %vm796, %v795, %v791
        %v798 = vld [vmem:[%s4] sm:$0xff]
        %v799 = vld [vmem:[%s4 + $0x8] sm:$0xff]
        %v800 = vld [vmem:[%s4 + $0x10] sm:$0xff]
        %v801 = vld [vmem:[%s4 + $0x18] sm:$0xff]
        %v802 = vld [vmem:[%s4 + $0x20] sm:$0xff]
        %v803 = vld [vmem:[%s4 + $0x28] sm:$0xff]
        %v804 = vld [vmem:[%s4 + $0x30] sm:$0xff]
        %v805 = vld [vmem:[%s4 + $0x38] sm:$0xff]
        %vm806 = vcmask 523264
        %v808 = vsel %vm806, %v797, 0
        %810 = vmatpush.msra.mxu0 0.0
        %811 = vmatpush.msra.mxu0 0.0
        %812 = vmatpush.msra.mxu0 0.0
        %813 = vmatpush.msra.mxu0 0.0
        %814 = vmatpush.msra.mxu0 0.0
        %815 = vmatpush.msra.mxu0 0.0
        %816 = vmatpush.msra.mxu0 0.0
        %817 = vmatpush.msra.mxu0 0.0
        %818 = vmatpush.msra.mxu0 %v805
        %819 = vmatpush.msra.mxu0 %v804
        %820 = vmatpush.msra.mxu0 %v803
        %821 = vmatpush.msra.mxu0 %v802
        %822 = vmatpush.msra.mxu0 %v801
        %823 = vmatpush.msra.mxu0 %v800
        %824 = vmatpush.msra.mxu0 %v799
        %825 = vmatpush.msra.mxu0 %v798
        %826 = vmatmul.f32.gmra.mxu0 %v808
        %v827 = vpop.f32.mrf.mxu0
        %v828 = vadd.f32 0.0, %v827
        %829 = vdwg.mxu0
        %v830 = vadd.f32 %v403, %v828
        %831 = vadd.xlane.f32.xlu0 %v830
        %v832 = vpop.xlane.xlu0 %831
        %v833 = vrcp.pop 128.0
        %v834 = vmul.f32 128.0, %v833
        %v835 = vsub.f32 1.0, %v834
        %v836 = vmul.f32 %v833, %v835
        %v837 = vadd.f32 %v833, %v836
        %vm838 = vweird.f32 %v833
        %v839 = vsel %vm838, %v833, %v837
        %v840 = vmul.f32 %v832, %v839
        %v841 = vsub.f32 %v830, %v840
        %v842 = vmul.f32 %v841, %v841
        %843 = vadd.xlane.f32.xlu0 %v842
        %v844 = vpop.xlane.xlu0 %843
        %v845 = vmul.f32 %v844, %v839
        %v846 = vadd.f32 %v845, 1e-05
        %v847 = vrsqrt.pop %v846
        %v848 = vmul.f32 %v847, %v846
        %v849 = vmul.f32 %v848, %v847
        %v850 = vmul.f32 0.5, %v849
        %v851 = vsub.f32 1.5, %v850
        %v852 = vmul.f32 %v847, %v851
        %vm853 = vweird.f32 %v846
        %vm854 = vweird.f32 %v847
        %vm855 = vmor %vm853, %vm854
        %v856 = vsel %vm855, %v847, %v852
        %v857 = vmul.f32 %v841, %v856
        %v858 = vld [vmem:[%s5] sm:$0x1]
        %v860 = vperm.slane %v858, 0
        %v862 = vmul.f32 %v857, %v860
        %v863 = vld [vmem:[%s6] sm:$0x1]
        %v865 = vperm.slane %v863, 0
        %v867 = vadd.f32 %v862, %v865
        %868 = vst [vmem:[%s355] sm:$0xff] %v867
        %s869 = sand.u32 %s208, 1
        %s870 = scalar_lea.sflag [#allocation5], %s869
        %s871 = sand.u32 %s208, 1
        %s872 = smul.addr %s871, 8
        %s873 = scalar_lea.vmem [#allocation8], %s872
        // Predicated region
        $region61: #{tpu_custom_call.1} parent=47 // pred_check
          %p874 = pneg %p218
        $region62: #{tpu_custom_call.1} parent=47 // pred_check_branch
          %876 = sbr.rel (%p874) target = $region64
        $region63: #{tpu_custom_call.1} parent=47 // pred_region
          %878 = vsyncadd %s870, 0
          %s879 = smul.addr %s31, 2
          %s880 = sadd.s32 %s32, %s879
          %s881 = smul.addr %s880, 8
          %s882 = scalar_lea.hbm %s7, %s881
          %s884 = sshll.u32 %s873, 4
          %s885 = int_to_ptr.vmem [resolvable:$true] %s884
          %s886 = sshll.u32 %s882, 4
          %s887 = int_to_ptr.hbm [resolvable:$true] %s886
          %889 = dma.vmem_to_hbm [thread:$0]  %s885, 128, %s887, %s870
        $region64: #{tpu_custom_call.1} parent=47 // pred_fallthru
          _
      $region48: #{tpu_custom_call.1} parent=5 // pred_fallthru
        _
      %p890 = scmp.le.s32.totalorder 2, %s22
      // Predicated region
      $region65: #{tpu_custom_call.1} parent=5 // pred_check
        %p891 = pneg %p890
      $region66: #{tpu_custom_call.1} parent=5 // pred_check_branch
        %893 = sbr.rel (%p891) target = $region68
      $region67: #{tpu_custom_call.1} parent=5 // pred_region
        %s894 = ssub.s32 %s22, 2
        // Predicated region
        $region69: #{tpu_custom_call.1} parent=67 // pred_check
          %p895 = pneg %p224
        $region70: #{tpu_custom_call.1} parent=67 // pred_check_branch
          %897 = sbr.rel (%p895) target = $region72
        $region71: #{tpu_custom_call.1} parent=67 // pred_region
          %s898 = sand.u32 %s209, 1
          %s899 = scalar_lea.sflag [#allocation5], %s898
          %s900 = sand.u32 %s209, 1
          %s901 = smul.addr %s900, 8
          %s902 = scalar_lea.vmem [#allocation8], %s901
          %904 = dma.done %s899, 128
        $region72: #{tpu_custom_call.1} parent=67 // pred_fallthru
          _
      $region68: #{tpu_custom_call.1} parent=5 // pred_fallthru
        _
    $region6: #{tpu_custom_call.1} parent=1 // loop_footer
      %s26 = sadd.s32 1, %s22
    $region7: #{tpu_custom_call.1} parent=1 // loop_footer_branch
      %21 = sbr.rel target = $region3
    $region8: #{tpu_custom_call.1} parent=1 // loop_exit
      _
    %905 = vsyncpa [#allocation4], 1
    %s906 = scalar_lea.sflag [#allocation4], 1
    %907 = vsyncpa %s906, 1
    %908 = vsyncpa [#allocation7], 1
    %s909 = scalar_lea.sflag [#allocation7], 1
    %910 = vsyncpa %s909, 1
    %911 = vsyncpa [#allocation5], 1
    %s912 = scalar_lea.sflag [#allocation5], 1
    %913 = vsyncpa %s912, 1

</llo_original>
